<compile_context>
chip_gen: v7x
topology: tpu7x:2x2x1
jax: 0.10.0
libtpu: 0.0.40
codegen_flags: <defaults>
</compile_context>

<pallas_src>
import numpy as np
import jax
import jax.numpy as jnp
from jax.experimental import pallas as pl
from jax.experimental.pallas import tpu as pltpu

# ----------------------------- static config -------------------------------
H = W = 16                              # spatial size of the input image
PATCH = 4                               # patch size of the surrogate encoder
NP_TOK = (H // PATCH) * (W // PATCH)    # 16 image-patch tokens
PD = PATCH * PATCH * 3                  # 48 flattened pixels per patch
D = 128                                 # hidden dim (lane friendly)
MAX_PROMPTS = 16                        # static padded number of click prompts


# ------------------------------ Pallas kernel --------------------------------
def _fused_kernel(patches_ref, wemb_ref, bemb_ref, prompts_ref, pool_ref, g_ref,
                  prob_ref, logit_ref):
    """Fused surrogate SAM2 hot path: encode + prompt attention + upsample + sigmoid.

    patches_ref : (NP_TOK, PD)       bf16  image patch tokens
    wemb_ref    : (PD, D)            bf16  patch-embedding weight
    bemb_ref    : (1, D)             f32   patch-embedding bias
    prompts_ref : (MAX_PROMPTS, D)   bf16  click prompt embeddings (zero padded)
    pool_ref    : (1, MAX_PROMPTS)   bf16  host-computed pooling weights (1/k on valid rows)
    g_ref       : (NP_TOK, H*W)      bf16  constant 0/1 nearest-neighbour upsample matrix
    prob_ref    : (1, H*W)           f32   sigmoid(full-res logits)   [lane dense]
    logit_ref   : (1, H*W)           f32   full-res logits            [lane dense]
    """
    # Patch embedding (bf16 MXU matmul, f32 accumulation)
    f = jnp.dot(patches_ref[...], wemb_ref[...],
                preferred_element_type=jnp.float32) + bemb_ref[...]     # (Np, D) f32
    f_bf = f.astype(jnp.bfloat16)

    p = prompts_ref[...]                                                # (Nq, D) bf16

    # Prompt -> image cross-attention; contract last dims directly
    # (no explicit .T through the XLU).
    scores = jax.lax.dot_general(
        p, f_bf, dimension_numbers=(((1,), (1,)), ((), ())),
        preferred_element_type=jnp.float32)                             # (Nq, Np)
    scores = scores * (1.0 / float(np.sqrt(D)))
    scores = scores - jnp.max(scores, axis=-1, keepdims=True)
    w = jnp.exp(scores)
    w = w * pl.reciprocal(jnp.sum(w, axis=-1, keepdims=True), approx=True)
    ctx = jnp.dot(w.astype(jnp.bfloat16), f_bf,
                  preferred_element_type=jnp.float32)                   # (Nq, D) f32

    # Mean-pool over valid prompts with host-computed 1/k weights (invalid rows
    # carry weight 0) — a tiny MXU matmul instead of iota/mask/reduce/recip.
    q = jnp.dot(pool_ref[...], ctx.astype(jnp.bfloat16),
                preferred_element_type=jnp.float32)                     # (1, D)

    # Per-patch mask logit = <feature, query>.
    low = jax.lax.dot_general(
        q.astype(jnp.bfloat16), f_bf,
        dimension_numbers=(((1,), (1,)), ((), ())),
        preferred_element_type=jnp.float32)                             # (1, Np)

    # Nearest-neighbour upsample as a matmul with the constant 0/1 scatter
    # matrix (keeps both output stores fully lane dense), bf16 operands.
    flat = jnp.dot(low.astype(jnp.bfloat16), g_ref[...],
                   preferred_element_type=jnp.float32)                  # (1, H*W)
    logit_ref[...] = flat
    # Exactly-bounded sigmoid via tanh: result is guaranteed inside [0, 1].
    prob_ref[...] = 0.5 * (jnp.tanh(0.5 * flat) + 1.0)


_VMEM = pl.BlockSpec(memory_space=pltpu.MemorySpace.VMEM)

_fused_call = pl.pallas_call(
    _fused_kernel,
    out_shape=(jax.ShapeDtypeStruct((1, H * W), jnp.float32),   # probabilities
               jax.ShapeDtypeStruct((1, H * W), jnp.float32)),  # logits
    in_specs=[_VMEM, _VMEM, _VMEM, _VMEM, _VMEM, _VMEM],
    out_specs=(_VMEM, _VMEM),
    cost_estimate=pl.CostEstimate(flops=344_064, transcendentals=544,
                                  bytes_accessed=28_704),
)


# ------------------------------ parameters ----------------------------------
def _make_upsample_matrix():
    """(NP_TOK, H*W) 0/1 matrix: nearest-neighbour PATCHx upsample + row-major flatten."""
    g = np.zeros((NP_TOK, H * W), np.float32)
    for y in range(H):
        for x in range(W):
            p = (y // PATCH) * (W // PATCH) + (x // PATCH)
            g[p, y * W + x] = 1.0
    return jnp.asarray(g, dtype=jnp.bfloat16)   # exact for 0/1


def init_params(key):
    k1, k2, k3, k4 = jax.random.split(key, 4)
    return {
        # device-resident kernel weights
        "w_embed": (jax.random.normal(k1, (PD, D), jnp.float32) * 0.02
                    ).astype(jnp.bfloat16),
        "b_embed": jax.random.normal(k2, (1, D), jnp.float32) * 0.02,
        "upsample": _make_upsample_matrix(),
        # host-resident prompt-embedding tables (the click coords live on host)
        "pe_freq": np.asarray(jax.random.normal(k3, (2, D // 2), jnp.float32)),
        "label_emb": np.asarray(jax.random.normal(k4, (2, D), jnp.float32) * 0.02),
    }


# --------------------- device-side predict (single dispatch) -----------------
@jax.jit
def _predict(w_embed, b_embed, g, patches, prompts, pool_w):
    """Single-dispatch device step: one pallas_call + trivial reshapes/slices."""
    probs, logits = _fused_call(patches, w_embed, b_embed, prompts, pool_w, g)
    prediction = probs.reshape(1, 1, H, W)                 # sigmoid(res)[None]
    # Low-res logits are recovered exactly by subsampling the nearest-neighbour
    # upsampled logits (each patch value was simply replicated).
    low_res = logits.reshape(H, W)[::PATCH, ::PATCH].reshape(
        1, H // PATCH, W // PATCH)
    return prediction, low_res


# ------------------------------- the model ----------------------------------
class ISModelSAM2Pallas:
    def __init__(self, params):
        self.params = params
        self.prev_mask = None
        self.with_prev_mask = True
        self.binary_prev_mask = False

    # mirrors ISModelSAM2.prepare_input (host numpy)
    def prepare_input(self, image):
        prev_mask = None
        if self.with_prev_mask:
            prev_mask = image[:, 3:, :, :]
            image = image[:, :3, :, :]
            if self.binary_prev_mask:
                prev_mask = (prev_mask > 0.5).astype(np.float32)
        return image, prev_mask

    # mirrors the host-side point munging of ISModelSAM2.forward, padded to a
    # static MAX_PROMPTS so device shapes never retrace.
    @staticmethod
    def _process_points(points_np):
        points_list = []
        n = points_np.shape[1]
        for idx in range(n):
            if points_np[0][idx][-1] < 0:
                continue
            if idx >= n // 2:
                points_list.append(np.hstack([0, points_np[0][idx]]))
            else:
                points_list.append(np.hstack([1, points_np[0][idx]]))
        coords_pad = np.zeros((MAX_PROMPTS, 2), np.float32)
        labels_pad = np.zeros((MAX_PROMPTS,), np.int64)
        if not points_list:
            return coords_pad, labels_pad, 0
        points_arr = np.array(points_list)
        all_list = points_arr[points_arr[:, 3].argsort()]
        coords = all_list[:, 1:3][:, ::-1]            # (y, x) -> (x, y)
        labels = all_list[:, 0]
        k = min(coords.shape[0], MAX_PROMPTS)
        coords_pad[:k] = coords[:k]
        labels_pad[:k] = labels[:k]
        return coords_pad, labels_pad, k

    # Click-prompt embeddings on the host (coords are already numpy): sin/cos
    # positional encoding + learned label embedding, plus the 1/k pool weights.
    def _embed_prompts(self, coords, labels, k):
        pe_freq = self.params["pe_freq"]
        label_emb = self.params["label_emb"]
        coords_norm = coords * np.array([1.0 / W, 1.0 / H], np.float32)
        pe = coords_norm @ pe_freq                                     # (Nq, D/2)
        pe = np.concatenate(
            [np.sin(2.0 * np.pi * pe), np.cos(2.0 * np.pi * pe)], axis=-1)
        prompts = pe + label_emb[labels.astype(np.int64)]              # (Nq, D)
        prompts[k:] = 0.0
        pool_w = np.zeros((1, MAX_PROMPTS), np.float32)
        if k > 0:
            pool_w[0, :k] = 1.0 / float(k)
        return prompts.astype(jnp.bfloat16), pool_w.astype(jnp.bfloat16)

    def forward(self, image, points):
        # Points are expected host-side (numpy); np.asarray is then a no-op,
        # so no per-call device sync.
        points_np = np.asarray(points)
        if points_np.shape[1] == 2:
            self.prev_mask = None

        # The original module pulls the image to the host for
        # predictor.set_image() (image.cpu().numpy()); we mirror that and do
        # the uint8 quantization + patchify in numpy with identical
        # truncation semantics.
        image_np = np.asarray(image, dtype=np.float32)
        image_np, _prev_mask = self.prepare_input(image_np)
        input_image = (image_np * 255.0)[0].transpose(1, 2, 0).astype(np.uint8)
        img = input_image.astype(np.float32) * (1.0 / 255.0)           # (H, W, 3)
        patches = (img.reshape(H // PATCH, PATCH, W // PATCH, PATCH, 3)
                      .transpose(0, 2, 1, 3, 4)
                      .reshape(NP_TOK, PD)).astype(jnp.bfloat16)

        coords_np, labels_np, k = self._process_points(points_np)
        prompts, pool_w = self._embed_prompts(coords_np, labels_np, k)

        prediction, low_res = _predict(
            self.params["w_embed"], self.params["b_embed"],
            self.params["upsample"], patches, prompts, pool_w)

        # multimask_output=False -> single mask, argmax(scores) == 0.
        # prev_mask stays a device array (no blocking host sync); it is not
        # consumed by the surrogate decoder (see module TODO).
        self.prev_mask = low_res
        return {"instances": prediction}


# --------------------------------- main --------------------------------------
if __name__ == "__main__":
    key = jax.random.PRNGKey(0)
    params = init_params(key)
    model = ISModelSAM2Pallas(params)

    # image: (1, 4, 16, 16) -> 3 RGB channels + 1 previous-mask channel.
    # Converted to host numpy once, mirroring the original module's
    # image.cpu() path inside forward().
    image = np.asarray(jax.random.uniform(jax.random.fold_in(key, 1),
                                          (1, 4, H, W), jnp.float32))
    # points stay host-side numpy: (1, 2, 3) rows are (y, x, click_index);
    # negative index = no click.
    points = np.array([[[5.0, 7.0, 0.0],
                        [-1.0, -1.0, -1.0]]], np.float32)

    out = model.forward(image, points)
    pred = jax.block_until_ready(out["instances"])
    assert pred.shape == (1, 1, H, W)
    assert bool(jnp.all(jnp.isfinite(pred)))
    assert bool(jnp.all((pred >= 0.0) & (pred <= 1.0)))
    assert model.prev_mask.shape == (1, H // PATCH, W // PATCH)
    print("KERNEL_OK")
</pallas_src>

<mosaic_0001>
module attributes {stable_mosaic.version = 11 : i64} {
  func.func @_fused_kernel(%arg0: memref<16x48xbf16, #tpu.memory_space<vmem>>, %arg1: memref<48x128xbf16, #tpu.memory_space<vmem>>, %arg2: memref<1x128xf32, #tpu.memory_space<vmem>>, %arg3: memref<16x128xbf16, #tpu.memory_space<vmem>>, %arg4: memref<1x16xbf16, #tpu.memory_space<vmem>>, %arg5: memref<16x256xbf16, #tpu.memory_space<vmem>>, %arg6: memref<1x256xf32, #tpu.memory_space<vmem>>, %arg7: memref<1x256xf32, #tpu.memory_space<vmem>>) attributes {dimension_semantics = [], scalar_prefetch = 0 : i64, scratch_operands = 0 : i64, tpu.core_type = #tpu.core_type<tc>} {
    %c0 = arith.constant 0 : index
    %c0_0 = arith.constant 0 : index
    %0 = vector.load %arg0[%c0, %c0_0] : memref<16x48xbf16, #tpu.memory_space<vmem>>, vector<16x48xbf16>
    %c0_1 = arith.constant 0 : index
    %c0_2 = arith.constant 0 : index
    %1 = vector.load %arg1[%c0_1, %c0_2] : memref<48x128xbf16, #tpu.memory_space<vmem>>, vector<48x128xbf16>
    %cst = arith.constant dense<0.000000e+00> : vector<16x128xf32>
    %2 = tpu.matmul %0, %1, %cst {dimension_numbers = #tpu.dot_dimension_numbers<[1], [0], [0], [1], [0, 0, 1, 1], [], []>} : vector<16x48xbf16>, vector<48x128xbf16>, vector<16x128xf32> -> vector<16x128xf32>
    %c0_3 = arith.constant 0 : index
    %c0_4 = arith.constant 0 : index
    %3 = vector.load %arg2[%c0_3, %c0_4] : memref<1x128xf32, #tpu.memory_space<vmem>>, vector<1x128xf32>
    %4 = vector.broadcast %3 : vector<1x128xf32> to vector<16x128xf32>
    %5 = arith.addf %2, %4 : vector<16x128xf32>
    %6 = arith.truncf %5 : vector<16x128xf32> to vector<16x128xbf16>
    %c0_5 = arith.constant 0 : index
    %c0_6 = arith.constant 0 : index
    %7 = vector.load %arg3[%c0_5, %c0_6] : memref<16x128xbf16, #tpu.memory_space<vmem>>, vector<16x128xbf16>
    %cst_7 = arith.constant dense<0.000000e+00> : vector<16x16xf32>
    %8 = tpu.matmul %7, %6, %cst_7 {dimension_numbers = #tpu.dot_dimension_numbers<[1], [1], [0], [0], [0, 0, 1, 0], [], []>} : vector<16x128xbf16>, vector<16x128xbf16>, vector<16x16xf32> -> vector<16x16xf32>
    %cst_8 = arith.constant 0.0883883461 : f32
    %9 = vector.broadcast %cst_8 : f32 to vector<16x16xf32>
    %10 = arith.mulf %8, %9 : vector<16x16xf32>
    %cst_9 = arith.constant dense<0xFF800000> : vector<16xf32>
    %11 = vector.multi_reduction <maximumf>, %10, %cst_9 [1] : vector<16x16xf32> to vector<16xf32>
    %12 = vector.shape_cast %11 : vector<16xf32> to vector<16x1xf32>
    %13 = vector.broadcast %12 : vector<16x1xf32> to vector<16x16xf32>
    %14 = arith.subf %10, %13 : vector<16x16xf32>
    %15 = math.exp %14 : vector<16x16xf32>
    %cst_10 = arith.constant dense<0.000000e+00> : vector<16xf32>
    %16 = vector.multi_reduction <add>, %15, %cst_10 [1] : vector<16x16xf32> to vector<16xf32>
    %17 = vector.shape_cast %16 : vector<16xf32> to vector<16x1xf32>
    %18 = tpu.reciprocal %17 {approx = true} : vector<16x1xf32> -> vector<16x1xf32>
    %19 = vector.broadcast %18 : vector<16x1xf32> to vector<16x16xf32>
    %20 = arith.mulf %15, %19 : vector<16x16xf32>
    %21 = arith.truncf %20 : vector<16x16xf32> to vector<16x16xbf16>
    %cst_11 = arith.constant dense<0.000000e+00> : vector<16x128xf32>
    %22 = tpu.matmul %21, %6, %cst_11 {dimension_numbers = #tpu.dot_dimension_numbers<[1], [0], [0], [1], [0, 0, 1, 1], [], []>} : vector<16x16xbf16>, vector<16x128xbf16>, vector<16x128xf32> -> vector<16x128xf32>
    %c0_12 = arith.constant 0 : index
    %c0_13 = arith.constant 0 : index
    %23 = vector.load %arg4[%c0_12, %c0_13] : memref<1x16xbf16, #tpu.memory_space<vmem>>, vector<1x16xbf16>
    %24 = arith.truncf %22 : vector<16x128xf32> to vector<16x128xbf16>
    %cst_14 = arith.constant dense<0.000000e+00> : vector<1x128xf32>
    %25 = tpu.matmul %23, %24, %cst_14 {dimension_numbers = #tpu.dot_dimension_numbers<[1], [0], [0], [1], [0, 0, 1, 1], [], []>} : vector<1x16xbf16>, vector<16x128xbf16>, vector<1x128xf32> -> vector<1x128xf32>
    %26 = arith.truncf %25 : vector<1x128xf32> to vector<1x128xbf16>
    %cst_15 = arith.constant dense<0.000000e+00> : vector<1x16xf32>
    %27 = tpu.matmul %26, %6, %cst_15 {dimension_numbers = #tpu.dot_dimension_numbers<[1], [1], [0], [0], [0, 0, 1, 0], [], []>} : vector<1x128xbf16>, vector<16x128xbf16>, vector<1x16xf32> -> vector<1x16xf32>
    %28 = arith.truncf %27 : vector<1x16xf32> to vector<1x16xbf16>
    %c0_16 = arith.constant 0 : index
    %c0_17 = arith.constant 0 : index
    %29 = vector.load %arg5[%c0_16, %c0_17] : memref<16x256xbf16, #tpu.memory_space<vmem>>, vector<16x256xbf16>
    %cst_18 = arith.constant dense<0.000000e+00> : vector<1x256xf32>
    %30 = tpu.matmul %28, %29, %cst_18 {dimension_numbers = #tpu.dot_dimension_numbers<[1], [0], [0], [1], [0, 0, 1, 1], [], []>} : vector<1x16xbf16>, vector<16x256xbf16>, vector<1x256xf32> -> vector<1x256xf32>
    %c0_19 = arith.constant 0 : index
    %c0_20 = arith.constant 0 : index
    %31 = vector.load %arg7[%c0_19, %c0_20] : memref<1x256xf32, #tpu.memory_space<vmem>>, vector<1x256xf32>
    tpu.vector_store %arg7[%c0_19, %c0_20], %30 {strides = array<i32>} : memref<1x256xf32, #tpu.memory_space<vmem>>, vector<1x256xf32>,
    %cst_21 = arith.constant 5.000000e-01 : f32
    %32 = vector.broadcast %cst_21 : f32 to vector<1x256xf32>
    %33 = arith.mulf %32, %30 : vector<1x256xf32>
    %34 = math.tanh %33 : vector<1x256xf32>
    %cst_22 = arith.constant 1.000000e+00 : f32
    %35 = vector.broadcast %cst_22 : f32 to vector<1x256xf32>
    %36 = arith.addf %34, %35 : vector<1x256xf32>
    %cst_23 = arith.constant 5.000000e-01 : f32
    %37 = vector.broadcast %cst_23 : f32 to vector<1x256xf32>
    %38 = arith.mulf %37, %36 : vector<1x256xf32>
    %c0_24 = arith.constant 0 : index
    %c0_25 = arith.constant 0 : index
    %39 = vector.load %arg6[%c0_24, %c0_25] : memref<1x256xf32, #tpu.memory_space<vmem>>, vector<1x256xf32>
    tpu.vector_store %arg6[%c0_24, %c0_25], %38 {strides = array<i32>} : memref<1x256xf32, #tpu.memory_space<vmem>>, vector<1x256xf32>,
    return
  }
}

</mosaic_0001>

<llo_original>
// kernel: _predict.1
$region0: #{_predict.1}
  #allocation0 [shape = 'u32[]', space=smem, size = 0x4, offset = 0x4, fixed_abs, tag = 'smem constant byte address 0x4 - core index']
  #allocation1 [shape = 'u32[144,128]{1,0:T(1,128)}', space=vmem, size = 0x12000, scoped, tag = 'internal scratch']
  %s0 = inlined_call_operand.vmem [shape: bf16[16,48], index: 0, kind: input, shape index: {}]
  %s1 = inlined_call_operand.hbm [shape: bf16[48,128], index: 1, kind: input, shape index: {}]
  %s2 = inlined_call_operand.vmem [shape: f32[1,128], index: 2, kind: input, shape index: {}]
  %s3 = inlined_call_operand.hbm [shape: bf16[16,128], index: 3, kind: input, shape index: {}]
  %s4 = inlined_call_operand.vmem [shape: bf16[1,16], index: 4, kind: input, shape index: {}]
  %s5 = inlined_call_operand.hbm [shape: bf16[16,256], index: 5, kind: input, shape index: {}]
  %s6 = inlined_call_operand.vmem [shape: f32[1,256], index: 6, kind: output, shape index: {0}]
  %s7 = inlined_call_operand.vmem [shape: f32[1,256], index: 7, kind: output, shape index: {1}]
  %8 = xla_tuple %s6, %s7
  %s9 = sld [smem:[#allocation0]]
  $region54: #{_predict.1} parent=0
    _
  %s11 = ssub.s32 1, %s9
  %s12 = scalar_select 0, %s11, %s9
  $region1: #{_predict.1} parent=0
    #allocation2 [shape = 'u8[12288]{0}', space=vmem, size = 0x3000, scoped, tag = 'input window, operand 1, single buffered']
    #allocation3 [shape = 's32[1]{0}', space=sflag, size = 0x4, scoped, tag = 'scoped memory for _predict.1']
    #allocation4 [shape = 'u8[4096]{0}', space=vmem, size = 0x1000, scoped, tag = 'input window, operand 3, single buffered']
    #allocation5 [shape = 's32[1]{0}', space=sflag, size = 0x4, scoped, tag = 'scoped memory for _predict.1']
    #allocation6 [shape = 'u8[8192]{0}', space=vmem, size = 0x2000, scoped, tag = 'input window, operand 5, single buffered']
    %13 = vsyncpa [#allocation3], 0
    %14 = vsyncpa [#allocation5], 0
    // Predicated region
    $region2: #{_predict.1} parent=1 // pred_check
      _
    $region3: #{_predict.1} parent=1 // pred_check_branch
      %16 = sbr.rel (0) target = $region5
    $region4: #{_predict.1} parent=1 // pred_region
      _
    $region5: #{_predict.1} parent=1 // pred_fallthru
      _
    // Predicated region
    $region6: #{_predict.1} parent=1 // pred_check
      _
    $region7: #{_predict.1} parent=1 // pred_check_branch
      %18 = sbr.rel (0) target = $region9
    $region8: #{_predict.1} parent=1 // pred_region
      %s20 = ssub.s32 384, 384
      %21 = vsyncadd [#allocation3], %s20
      %s22 = sshll.u32 [#allocation2], 4
      %s23 = int_to_ptr.vmem [resolvable:$true] %s22
      %28 = dma.hbm_to_vmem [thread:$0]  %s1, 384, %s23, [#allocation3], 64, 64, 4
    $region9: #{_predict.1} parent=1 // pred_fallthru
      _
    // Predicated region
    $region10: #{_predict.1} parent=1 // pred_check
      _
    $region11: #{_predict.1} parent=1 // pred_check_branch
      %30 = sbr.rel (0) target = $region13
    $region12: #{_predict.1} parent=1 // pred_region
      _
    $region13: #{_predict.1} parent=1 // pred_fallthru
      _
    // Predicated region
    $region14: #{_predict.1} parent=1 // pred_check
      _
    $region15: #{_predict.1} parent=1 // pred_check_branch
      %32 = sbr.rel (0) target = $region17
    $region16: #{_predict.1} parent=1 // pred_region
      %s34 = ssub.s32 128, 128
      %35 = vsyncadd [#allocation5], %s34
      %s36 = sshll.u32 [#allocation4], 4
      %s37 = int_to_ptr.vmem [resolvable:$true] %s36
      %42 = dma.hbm_to_vmem [thread:$0]  %s3, 128, %s37, [#allocation5], 64, 64, 4
    $region17: #{_predict.1} parent=1 // pred_fallthru
      _
    // Predicated region
    $region18: #{_predict.1} parent=1 // pred_check
      _
    $region19: #{_predict.1} parent=1 // pred_check_branch
      %44 = sbr.rel (0) target = $region21
    $region20: #{_predict.1} parent=1 // pred_region
      _
    $region21: #{_predict.1} parent=1 // pred_fallthru
      _
    // Predicated region
    $region22: #{_predict.1} parent=1 // pred_check
      _
    $region23: #{_predict.1} parent=1 // pred_check_branch
      %46 = sbr.rel (0) target = $region25
    $region24: #{_predict.1} parent=1 // pred_region
      %s48 = ssub.s32 256, 256
      %49 = vsyncadd [#allocation5], %s48
      %s50 = sshll.u32 [#allocation6], 4
      %s51 = int_to_ptr.vmem [resolvable:$true] %s50
      %56 = dma.hbm_to_vmem [thread:$0]  %s5, 256, %s51, [#allocation5], 128, 128, 8
    $region25: #{_predict.1} parent=1 // pred_fallthru
      _
    // Predicated region
    $region26: #{_predict.1} parent=1 // pred_check
      _
    $region27: #{_predict.1} parent=1 // pred_check_branch
      %58 = sbr.rel (0) target = $region29
    $region28: #{_predict.1} parent=1 // pred_region
      %59 = dma.done [#allocation3], 384
    $region29: #{_predict.1} parent=1 // pred_fallthru
      _
    // Predicated region
    $region30: #{_predict.1} parent=1 // pred_check
      _
    $region31: #{_predict.1} parent=1 // pred_check_branch
      %61 = sbr.rel (0) target = $region33
    $region32: #{_predict.1} parent=1 // pred_region
      %62 = dma.done [#allocation5], 128
    $region33: #{_predict.1} parent=1 // pred_fallthru
      _
    // Predicated region
    $region34: #{_predict.1} parent=1 // pred_check
      _
    $region35: #{_predict.1} parent=1 // pred_check_branch
      %64 = sbr.rel (0) target = $region37
    $region36: #{_predict.1} parent=1 // pred_region
      %65 = dma.done [#allocation5], 256
    $region37: #{_predict.1} parent=1 // pred_fallthru
      _
    %v67 = vld [vmem:[%s0] sm:$0xf]
    %v68 = vld [vmem:[%s0 + $0x4] sm:$0xf]
    %v69 = vld [vmem:[#allocation2] sm:$0xf]
    %v70 = vld [vmem:[#allocation2 + $0x4] sm:$0xf]
    %v71 = vld [vmem:[#allocation2 + $0x8] sm:$0xf]
    %v72 = vld [vmem:[#allocation2 + $0xc] sm:$0xf]
    %v73 = vld [vmem:[#allocation2 + $0x10] sm:$0xf]
    %v74 = vld [vmem:[#allocation2 + $0x14] sm:$0xf]
    %v75 = vld [vmem:[%s2] sm:$0x1]
    %v77 = vlaneseq
    %v78 = vshrl.u32 %v77, 7
    %v79 = vsub.s32 0, %v78
    %v80 = vrot.slane %v75, %v79
    %v84 = vunpack.c.l.b16 %v67
    %v85 = vunpack.c.l.b16 %v68
    %v86 = vpack.c.b16 %v85, %v84
    %v93 = vunpack.c.l.b16 %v69
    %v94 = vunpack.c.l.b16 %v70
    %v95 = vunpack.c.l.b16 %v71
    %v96 = vunpack.c.l.b16 %v72
    %v97 = vunpack.c.l.b16 %v73
    %v98 = vunpack.c.l.b16 %v74
    %v99 = vpack.c.b16 %v94, %v93
    %v100 = vpack.c.b16 %v96, %v95
    %v101 = vpack.c.b16 %v98, %v97
    %vm105 = vcmask 392192
    %v107 = vsel %vm105, %v86, 0
    %109 = vmatprep.subr.bf16.mxu0 0
    %110 = vmatpush1.bf16.msra.mxu0 %v99
    %111 = vmatprep.subr.bf16.mxu0 0
    %112 = vmatpush1.bf16.msra.mxu0 %v100
    %113 = vmatprep.subr.bf16.mxu0 0
    %114 = vmatpush1.bf16.msra.mxu0 %v101
    %115 = vmatprep.subr.bf16.mxu0 0
    %116 = vmatpush1.bf16.msra.mxu0 0
    %117 = vmatprep.subr.bf16.mxu0 0
    %118 = vmatpush1.bf16.msra.mxu0 0
    %119 = vmatprep.subr.bf16.mxu0 0
    %120 = vmatpush1.bf16.msra.mxu0 0
    %121 = vmatprep.subr.bf16.mxu0 0
    %122 = vmatpush1.bf16.msra.mxu0 0
    %123 = vmatprep.subr.bf16.mxu0 0
    %124 = vmatpush1.bf16.msra.mxu0 0
    %125 = vmatprep.subr.bf16.mxu0 0
    %126 = vmatpush1.bf16.msra.mxu0 0
    %127 = vmatprep.subr.bf16.mxu0 0
    %128 = vmatpush1.bf16.msra.mxu0 0
    %129 = vmatprep.subr.bf16.mxu0 0
    %130 = vmatpush1.bf16.msra.mxu0 0
    %131 = vmatprep.subr.bf16.mxu0 0
    %132 = vmatpush1.bf16.msra.mxu0 0
    %133 = vmatprep.subr.bf16.mxu0 0
    %134 = vmatpush1.bf16.msra.mxu0 0
    %135 = vmatprep.subr.bf16.mxu0 0
    %136 = vmatpush1.bf16.msra.mxu0 0
    %137 = vmatprep.subr.bf16.mxu0 0
    %138 = vmatpush1.bf16.msra.mxu0 0
    %139 = vmatprep.subr.bf16.mxu0 0
    %140 = vmatpush1.bf16.msra.mxu0 0
    %141 = vmatprep.mubr.bf16.mxu0 0
    %142 = vmatmul.mubr.bf16.gmra.mrb[0].mxu0 %v107
    %v143 = vpop.f32.mrb[0].mxu0
    %v144 = vadd.f32 %v80, %v143
    %v145 = vpop.f32.mrb[0].mxu0
    %v146 = vpop.f32.mrb[0].mxu0
    %v147 = vadd.f32 %v80, %v146
    %v148 = vpop.f32.mrb[0].mxu0
    %149 = vdwg.mxu0
    %v150 = vpack.c.bf16 %v147, %v144
    %v151 = vld [vmem:[#allocation4] sm:$0xf]
    %v152 = vld [vmem:[#allocation4 + $0x4] sm:$0xf]
    %v155 = vunpack.c.l.b16 %v151
    %v156 = vunpack.c.l.b16 %v152
    %v157 = vpack.c.b16 %v156, %v155
    %159 = vmatprep.subr.bf16.mxu0 0
    %160 = vmatpush1.bf16.xpose.msra.mxu0 %v150
    %161 = vmatprep.subr.bf16.mxu0 0
    %162 = vmatpush1.bf16.xpose.msra.mxu0 0
    %163 = vmatprep.subr.bf16.mxu0 0
    %164 = vmatpush1.bf16.xpose.msra.mxu0 0
    %165 = vmatprep.subr.bf16.mxu0 0
    %166 = vmatpush1.bf16.xpose.msra.mxu0 0
    %167 = vmatprep.subr.bf16.mxu0 0
    %168 = vmatpush1.bf16.xpose.msra.mxu0 0
    %169 = vmatprep.subr.bf16.mxu0 0
    %170 = vmatpush1.bf16.xpose.msra.mxu0 0
    %171 = vmatprep.subr.bf16.mxu0 0
    %172 = vmatpush1.bf16.xpose.msra.mxu0 0
    %173 = vmatprep.subr.bf16.mxu0 0
    %174 = vmatpush1.bf16.xpose.msra.mxu0 0
    %175 = vmatprep.subr.bf16.mxu0 0
    %176 = vmatpush1.bf16.xpose.msra.mxu0 0
    %177 = vmatprep.subr.bf16.mxu0 0
    %178 = vmatpush1.bf16.xpose.msra.mxu0 0
    %179 = vmatprep.subr.bf16.mxu0 0
    %180 = vmatpush1.bf16.xpose.msra.mxu0 0
    %181 = vmatprep.subr.bf16.mxu0 0
    %182 = vmatpush1.bf16.xpose.msra.mxu0 0
    %183 = vmatprep.subr.bf16.mxu0 0
    %184 = vmatpush1.bf16.xpose.msra.mxu0 0
    %185 = vmatprep.subr.bf16.mxu0 0
    %186 = vmatpush1.bf16.xpose.msra.mxu0 0
    %187 = vmatprep.subr.bf16.mxu0 0
    %188 = vmatpush1.bf16.xpose.msra.mxu0 0
    %189 = vmatprep.subr.bf16.mxu0 0
    %190 = vmatpush1.bf16.xpose.msra.mxu0 0
    %191 = vmatprep.mubr.bf16.mxu0 0
    %192 = vmatmul.mubr.bf16.gmra.mrb[0].mxu0 %v157
    %v193 = vpop.f32.mrb[0].mxu0
    %v194 = vadd.f32 0.0, %v193
    %v195 = vpop.f32.mrb[0].mxu0
    %v196 = vpop.f32.mrb[0].mxu0
    %v197 = vadd.f32 0.0, %v196
    %v198 = vpop.f32.mrb[0].mxu0
    %199 = vdwg.mxu0
    %v200 = vmul.f32 %v194, 0.088388346
    %v201 = vmul.f32 %v197, 0.088388346
    %vm202 = vcmask 130048
    %v203 = vsel %vm202, %v200, -inf
    %204 = vmax.xlane.f32.xlu0 %v203
    %v205 = vpop.xlane.xlu0 %204
    %v206 = vsel %vm202, %v201, -inf
    %207 = vmax.xlane.f32.xlu0 %v206
    %v208 = vpop.xlane.xlu0 %207
    %v209 = vsub.f32 %v200, %v205
    %v210 = vsub.f32 %v201, %v208
    %v211 = vmul.f32 %v209, 1.442695
    %v212 = vpow.pop %v211
    %v213 = vmul.f32 %v210, 1.442695
    %v214 = vpow.pop %v213
    %v215 = vsel %vm202, %v212, 0.0
    %216 = vadd.xlane.f32.xlu0 %v215
    %v217 = vpop.xlane.xlu0 %216
    %v218 = vsel %vm202, %v214, 0.0
    %219 = vadd.xlane.f32.xlu0 %v218
    %v220 = vpop.xlane.xlu0 %219
    %v221 = vrcp.pop %v217
    %v222 = vrcp.pop %v220
    %v223 = vmul.f32 %v212, %v221
    %v224 = vmul.f32 %v214, %v222
    %v225 = vpack.c.bf16 %v224, %v223
    %v227 = vsel %vm202, %v225, 0
    %229 = vmatprep.subr.bf16.mxu0 0
    %230 = vmatpush1.bf16.msra.mxu0 %v150
    %231 = vmatprep.subr.bf16.mxu0 0
    %232 = vmatpush1.bf16.msra.mxu0 0
    %233 = vmatprep.subr.bf16.mxu0 0
    %234 = vmatpush1.bf16.msra.mxu0 0
    %235 = vmatprep.subr.bf16.mxu0 0
    %236 = vmatpush1.bf16.msra.mxu0 0
    %237 = vmatprep.subr.bf16.mxu0 0
    %238 = vmatpush1.bf16.msra.mxu0 0
    %239 = vmatprep.subr.bf16.mxu0 0
    %240 = vmatpush1.bf16.msra.mxu0 0
    %241 = vmatprep.subr.bf16.mxu0 0
    %242 = vmatpush1.bf16.msra.mxu0 0
    %243 = vmatprep.subr.bf16.mxu0 0
    %244 = vmatpush1.bf16.msra.mxu0 0
    %245 = vmatprep.subr.bf16.mxu0 0
    %246 = vmatpush1.bf16.msra.mxu0 0
    %247 = vmatprep.subr.bf16.mxu0 0
    %248 = vmatpush1.bf16.msra.mxu0 0
    %249 = vmatprep.subr.bf16.mxu0 0
    %250 = vmatpush1.bf16.msra.mxu0 0
    %251 = vmatprep.subr.bf16.mxu0 0
    %252 = vmatpush1.bf16.msra.mxu0 0
    %253 = vmatprep.subr.bf16.mxu0 0
    %254 = vmatpush1.bf16.msra.mxu0 0
    %255 = vmatprep.subr.bf16.mxu0 0
    %256 = vmatpush1.bf16.msra.mxu0 0
    %257 = vmatprep.subr.bf16.mxu0 0
    %258 = vmatpush1.bf16.msra.mxu0 0
    %259 = vmatprep.subr.bf16.mxu0 0
    %260 = vmatpush1.bf16.msra.mxu0 0
    %261 = vmatprep.mubr.bf16.mxu0 0
    %262 = vmatmul.mubr.bf16.gmra.mrb[0].mxu0 %v227
    %v263 = vpop.f32.mrb[0].mxu0
    %v264 = vadd.f32 0.0, %v263
    %v265 = vpop.f32.mrb[0].mxu0
    %v266 = vpop.f32.mrb[0].mxu0
    %v267 = vadd.f32 0.0, %v266
    %v268 = vpop.f32.mrb[0].mxu0
    %269 = vdwg.mxu0
    %v270 = vld [vmem:[%s4] sm:$0x1]
    %v271 = vpack.c.bf16 %v267, %v264
    %v273 = vsel %vm202, %v270, 0
    %275 = vmatprep.subr.bf16.mxu0 0
    %276 = vmatpush1.bf16.msra.mxu0 %v271
    %277 = vmatprep.subr.bf16.mxu0 0
    %278 = vmatpush1.bf16.msra.mxu0 0
    %279 = vmatprep.subr.bf16.mxu0 0
    %280 = vmatpush1.bf16.msra.mxu0 0
    %281 = vmatprep.subr.bf16.mxu0 0
    %282 = vmatpush1.bf16.msra.mxu0 0
    %283 = vmatprep.subr.bf16.mxu0 0
    %284 = vmatpush1.bf16.msra.mxu0 0
    %285 = vmatprep.subr.bf16.mxu0 0
    %286 = vmatpush1.bf16.msra.mxu0 0
    %287 = vmatprep.subr.bf16.mxu0 0
    %288 = vmatpush1.bf16.msra.mxu0 0
    %289 = vmatprep.subr.bf16.mxu0 0
    %290 = vmatpush1.bf16.msra.mxu0 0
    %291 = vmatprep.subr.bf16.mxu0 0
    %292 = vmatpush1.bf16.msra.mxu0 0
    %293 = vmatprep.subr.bf16.mxu0 0
    %294 = vmatpush1.bf16.msra.mxu0 0
    %295 = vmatprep.subr.bf16.mxu0 0
    %296 = vmatpush1.bf16.msra.mxu0 0
    %297 = vmatprep.subr.bf16.mxu0 0
    %298 = vmatpush1.bf16.msra.mxu0 0
    %299 = vmatprep.subr.bf16.mxu0 0
    %300 = vmatpush1.bf16.msra.mxu0 0
    %301 = vmatprep.subr.bf16.mxu0 0
    %302 = vmatpush1.bf16.msra.mxu0 0
    %303 = vmatprep.subr.bf16.mxu0 0
    %304 = vmatpush1.bf16.msra.mxu0 0
    %305 = vmatprep.subr.bf16.mxu0 0
    %306 = vmatpush1.bf16.msra.mxu0 0
    %307 = vmatprep.mubr.bf16.mxu0 0
    %308 = vmatmul.mubr.bf16.gmra.mrb[0].mxu0 %v273
    %v309 = vpop.f32.mrb[0].mxu0
    %v310 = vadd.f32 0.0, %v309
    %v311 = vpop.f32.mrb[0].mxu0
    %v312 = vpop.f32.mrb[0].mxu0
    %v313 = vpop.f32.mrb[0].mxu0
    %314 = vdwg.mxu0
    %v315 = vpack.c.bf16 %v310, %v310
    %316 = vmatprep.subr.bf16.mxu0 0
    %317 = vmatpush1.bf16.xpose.msra.mxu0 %v150
    %318 = vmatprep.subr.bf16.mxu0 0
    %319 = vmatpush1.bf16.xpose.msra.mxu0 0
    %320 = vmatprep.subr.bf16.mxu0 0
    %321 = vmatpush1.bf16.xpose.msra.mxu0 0
    %322 = vmatprep.subr.bf16.mxu0 0
    %323 = vmatpush1.bf16.xpose.msra.mxu0 0
    %324 = vmatprep.subr.bf16.mxu0 0
    %325 = vmatpush1.bf16.xpose.msra.mxu0 0
    %326 = vmatprep.subr.bf16.mxu0 0
    %327 = vmatpush1.bf16.xpose.msra.mxu0 0
    %328 = vmatprep.subr.bf16.mxu0 0
    %329 = vmatpush1.bf16.xpose.msra.mxu0 0
    %330 = vmatprep.subr.bf16.mxu0 0
    %331 = vmatpush1.bf16.xpose.msra.mxu0 0
    %332 = vmatprep.subr.bf16.mxu0 0
    %333 = vmatpush1.bf16.xpose.msra.mxu0 0
    %334 = vmatprep.subr.bf16.mxu0 0
    %335 = vmatpush1.bf16.xpose.msra.mxu0 0
    %336 = vmatprep.subr.bf16.mxu0 0
    %337 = vmatpush1.bf16.xpose.msra.mxu0 0
    %338 = vmatprep.subr.bf16.mxu0 0
    %339 = vmatpush1.bf16.xpose.msra.mxu0 0
    %340 = vmatprep.subr.bf16.mxu0 0
    %341 = vmatpush1.bf16.xpose.msra.mxu0 0
    %342 = vmatprep.subr.bf16.mxu0 0
    %343 = vmatpush1.bf16.xpose.msra.mxu0 0
    %344 = vmatprep.subr.bf16.mxu0 0
    %345 = vmatpush1.bf16.xpose.msra.mxu0 0
    %346 = vmatprep.subr.bf16.mxu0 0
    %347 = vmatpush1.bf16.xpose.msra.mxu0 0
    %348 = vmatprep.mubr.bf16.mxu0 0
    %349 = vmatmul.mubr.bf16.gmra.mrb[0].mxu0 %v315
    %v350 = vpop.f32.mrb[0].mxu0
    %v351 = vadd.f32 0.0, %v350
    %v352 = vpop.f32.mrb[0].mxu0
    %v353 = vpop.f32.mrb[0].mxu0
    %v354 = vpop.f32.mrb[0].mxu0
    %355 = vdwg.mxu0
    %v356 = vpack.c.bf16 %v351, %v351
    %v357 = vld [vmem:[#allocation6] sm:$0xff]
    %v358 = vld [vmem:[#allocation6 + $0x8] sm:$0xff]
    %v361 = vunpack.c.l.b16 %v357
    %v362 = vunpack.c.h.b16 %v357
    %v363 = vunpack.c.l.b16 %v358
    %v364 = vunpack.c.h.b16 %v358
    %v365 = vpack.c.b16 %v363, %v361
    %v366 = vpack.c.b16 %v364, %v362
    %v370 = vsel %vm202, %v356, 0
    %372 = vmatprep.subr.bf16.mxu0 %v366
    %373 = vmatpush1.bf16.msra.mxu0 %v365
    %374 = vmatprep.subr.bf16.mxu0 0
    %375 = vmatpush1.bf16.msra.mxu0 0
    %376 = vmatprep.subr.bf16.mxu0 0
    %377 = vmatpush1.bf16.msra.mxu0 0
    %378 = vmatprep.subr.bf16.mxu0 0
    %379 = vmatpush1.bf16.msra.mxu0 0
    %380 = vmatprep.subr.bf16.mxu0 0
    %381 = vmatpush1.bf16.msra.mxu0 0
    %382 = vmatprep.subr.bf16.mxu0 0
    %383 = vmatpush1.bf16.msra.mxu0 0
    %384 = vmatprep.subr.bf16.mxu0 0
    %385 = vmatpush1.bf16.msra.mxu0 0
    %386 = vmatprep.subr.bf16.mxu0 0
    %387 = vmatpush1.bf16.msra.mxu0 0
    %388 = vmatprep.subr.bf16.mxu0 0
    %389 = vmatpush1.bf16.msra.mxu0 0
    %390 = vmatprep.subr.bf16.mxu0 0
    %391 = vmatpush1.bf16.msra.mxu0 0
    %392 = vmatprep.subr.bf16.mxu0 0
    %393 = vmatpush1.bf16.msra.mxu0 0
    %394 = vmatprep.subr.bf16.mxu0 0
    %395 = vmatpush1.bf16.msra.mxu0 0
    %396 = vmatprep.subr.bf16.mxu0 0
    %397 = vmatpush1.bf16.msra.mxu0 0
    %398 = vmatprep.subr.bf16.mxu0 0
    %399 = vmatpush1.bf16.msra.mxu0 0
    %400 = vmatprep.subr.bf16.mxu0 0
    %401 = vmatpush1.bf16.msra.mxu0 0
    %402 = vmatprep.subr.bf16.mxu0 0
    %403 = vmatpush1.bf16.msra.mxu0 0
    %404 = vmatprep.mubr.bf16.mxu0 0
    %405 = vmatmul.mubr.bf16.gmra.mrb[0].mxu0 %v370
    %v406 = vpop.f32.mrb[0].mxu0
    %v407 = vadd.f32 0.0, %v406
    %v408 = vpop.f32.mrb[0].mxu0
    %v409 = vadd.f32 0.0, %v408
    %v410 = vpop.f32.mrb[0].mxu0
    %v411 = vpop.f32.mrb[0].mxu0
    %412 = vdwg.mxu0
    %v415 = vcombine.low %v407, %v409
    %v417 = vunpack.c.l.s4 1966171168
    %v418 = vunpack.c.0.s8 %v417
    %v419 = vlaneseq
    %v420 = vshrl.u32 %v419, 7
    %v421 = vsub.s32 %v418, %v420
    %v422 = vrot.slane %v415, %v421
    %v424 = vunpack.c.l.s4 1966171168
    %v425 = vunpack.c.0.s8 %v424
    %v426 = vlaneseq
    %v427 = vshrl.u32 %v426, 7
    %v428 = vsub.s32 %v425, %v427
    %v429 = vrot.slane %v422, %v428
    %v431 = vlaneseq
    %vm432 = vcmp.ge.s32.totalorder %v431, 0
    %vm433 = vcmp.lt.s32.totalorder %v431, 256
    %vm434 = vmand %vm432, %vm433
    %435 = vst.msk [vmem:[%s7] sm:$0x3] %vm434, %v429
    %v436 = vmul.f32 %v407, 0.5
    %v437 = vmul.f32 %v409, 0.5
    %v438 = vtanh.pop %v436
    %v439 = vtanh.pop %v437
    %v440 = vadd.f32 %v438, 1.0
    %v441 = vadd.f32 %v439, 1.0
    %v442 = vmul.f32 %v440, 0.5
    %v443 = vmul.f32 %v441, 0.5
    %v446 = vcombine.low %v442, %v443
    %v448 = vunpack.c.l.s4 1966171168
    %v449 = vunpack.c.0.s8 %v448
    %v450 = vlaneseq
    %v451 = vshrl.u32 %v450, 7
    %v452 = vsub.s32 %v449, %v451
    %v453 = vrot.slane %v446, %v452
    %v455 = vunpack.c.l.s4 1966171168
    %v456 = vunpack.c.0.s8 %v455
    %v457 = vlaneseq
    %v458 = vshrl.u32 %v457, 7
    %v459 = vsub.s32 %v456, %v458
    %v460 = vrot.slane %v453, %v459
    %462 = vst.msk [vmem:[%s6] sm:$0x3] %vm434, %v460
    // Predicated region
    $region38: #{_predict.1} parent=1 // pred_check
      _
    $region39: #{_predict.1} parent=1 // pred_check_branch
      %464 = sbr.rel (0) target = $region41
    $region40: #{_predict.1} parent=1 // pred_region
      _
    $region41: #{_predict.1} parent=1 // pred_fallthru
      _
    // Predicated region
    $region42: #{_predict.1} parent=1 // pred_check
      _
    $region43: #{_predict.1} parent=1 // pred_check_branch
      %466 = sbr.rel (0) target = $region45
    $region44: #{_predict.1} parent=1 // pred_region
      _
    $region45: #{_predict.1} parent=1 // pred_fallthru
      _
    // Predicated region
    $region46: #{_predict.1} parent=1 // pred_check
      _
    $region47: #{_predict.1} parent=1 // pred_check_branch
      %468 = sbr.rel (0) target = $region49
    $region48: #{_predict.1} parent=1 // pred_region
      _
    $region49: #{_predict.1} parent=1 // pred_fallthru
      _
    // Predicated region
    $region50: #{_predict.1} parent=1 // pred_check
      _
    $region51: #{_predict.1} parent=1 // pred_check_branch
      %470 = sbr.rel (0) target = $region53
    $region52: #{_predict.1} parent=1 // pred_region
      _
    $region53: #{_predict.1} parent=1 // pred_fallthru
      _
    %471 = vsyncpa [#allocation3], 1
    %472 = vsyncpa [#allocation5], 1

</llo_original>
